<compile_context>
chip_gen: v6e
topology: v6e:2x2x1
jax: 0.10.0
libtpu: 0.0.40
codegen_flags: <defaults>
</compile_context>

<pallas_src>
import functools
import math

import jax
import jax.numpy as jnp
from jax.experimental import pallas as pl
from jax.experimental.pallas import tpu as pltpu

PAD = 0          # Constants.PAD
NEG_INF = -1e9
LN_EPS = 1e-12


# --------------------------------------------------------------------------
# Tile-size policy
# --------------------------------------------------------------------------
def _tpu_defaults():
    """128 MiB VMEM parts (v5e/v6e): 512 tiles + raised scoped-VMEM limit.
    64 MiB parts (v7x): 256 tiles, default limit."""
    vmem = 64 * 1024 * 1024
    try:
        vmem = getattr(pltpu.get_tpu_info(), "vmem_capacity_bytes", vmem)
    except Exception:
        pass
    if vmem >= 100 * 1024 * 1024:
        return {"tm": 512, "tn": 512, "tk": 512, "vmem_limit": 96 * 1024 * 1024}
    return {"tm": 256, "tn": 256, "tk": 512, "vmem_limit": None}


_DEF = _tpu_defaults()


def _pick_tile(dim, pref, align):
    """Largest legal tile <= pref: the full dim when it already fits, otherwise the
    largest multiple of `align` that divides dim (never the whole axis unless no
    aligned divisor exists)."""
    if dim <= pref:
        return dim
    t = (pref // align) * align
    while t >= align:
        if dim % t == 0:
            return t
        t -= align
    # TODO(synk): pad the operand up to an aligned multiple instead of using a
    # full-extent block for prime-ish sizes.
    return dim


def _to_bf16(x):
    return x if x.dtype == jnp.bfloat16 else x.astype(jnp.bfloat16)


# --------------------------------------------------------------------------
# Tiled dense matmul (bias + optional GELU epilogue), bf16 MXU / f32 acc,
# bf16 activations out by default.
# --------------------------------------------------------------------------
def _dense_kernel(x_ref, w_ref, b_ref, o_ref, acc_ref, *, activation):
    @pl.when(pl.program_id(2) == 0)
    def _():
        acc_ref[...] = jnp.zeros_like(acc_ref)

    acc_ref[...] += jnp.dot(_to_bf16(x_ref[...]), w_ref[...],
                            preferred_element_type=jnp.float32)

    @pl.when(pl.program_id(2) == pl.num_programs(2) - 1)
    def _():
        y = acc_ref[...] + b_ref[...]
        if activation == "gelu":
            # exact (erf-based) GELU, matching nn.GELU default
            y = 0.5 * y * (1.0 + jax.lax.erf(y * 0.7071067811865476))
        o_ref[...] = y.astype(o_ref.dtype)


def dense(x, w, b, activation=None, out_dtype=jnp.bfloat16,
          *, tm=None, tn=None, tk=None):
    """x: (M, K) f32/bf16, w: (K, N) bf16, b: (N,) f32 -> (M, N) out_dtype."""
    M, K = x.shape
    N = w.shape[1]
    tm = _pick_tile(M, tm or _DEF["tm"], 8)
    tn = _pick_tile(N, tn or _DEF["tn"], 128)
    tk = _pick_tile(K, tk or _DEF["tk"], 128)
    return pl.pallas_call(
        functools.partial(_dense_kernel, activation=activation),
        out_shape=jax.ShapeDtypeStruct((M, N), out_dtype),
        grid=(M // tm, N // tn, K // tk),
        in_specs=[pl.BlockSpec((tm, tk), lambda i, j, k: (i, k)),
                  pl.BlockSpec((tk, tn), lambda i, j, k: (k, j)),
                  pl.BlockSpec((1, tn), lambda i, j, k: (0, j))],
        out_specs=pl.BlockSpec((tm, tn), lambda i, j, k: (i, j)),
        scratch_shapes=[pltpu.VMEM((tm, tn), jnp.float32)],
        compiler_params=pltpu.CompilerParams(
            dimension_semantics=("parallel", "parallel", "arbitrary"),
            vmem_limit_bytes=_DEF["vmem_limit"]),
    )(x, w, b.reshape(1, N))


# --------------------------------------------------------------------------
# Fused: out = LayerNorm(x @ w + b + residual)   (K-tiled with f32 accumulator)
# --------------------------------------------------------------------------
def _dense_ln_kernel(x_ref, w_ref, b_ref, r_ref, g_ref, bb_ref, o_ref, acc_ref, *, eps):
    @pl.when(pl.program_id(1) == 0)
    def _():
        acc_ref[...] = jnp.zeros_like(acc_ref)

    acc_ref[...] += jnp.dot(_to_bf16(x_ref[...]), w_ref[...],
                            preferred_element_type=jnp.float32)

    @pl.when(pl.program_id(1) == pl.num_programs(1) - 1)
    def _():
        y = acc_ref[...] + b_ref[...] + r_ref[...]
        # one-pass LN statistics: var = E[y^2] - E[y]^2
        ex = jnp.mean(y, axis=-1, keepdims=True)
        ex2 = jnp.mean(y * y, axis=-1, keepdims=True)
        var = jnp.maximum(ex2 - ex * ex, 0.0)
        out = (y - ex) * jax.lax.rsqrt(var + eps) * g_ref[...] + bb_ref[...]
        o_ref[...] = out.astype(o_ref.dtype)


def dense_ln_residual(x, w, b, residual, gamma, beta, *, eps=LN_EPS, tm=None, tk=None):
    """x: (M, K) bf16/f32, w: (K, N) bf16, residual: (M, N) f32 -> (M, N) f32."""
    M, K = x.shape
    N = w.shape[1]
    tm = _pick_tile(M, tm or _DEF["tm"], 8)
    tk = _pick_tile(K, tk or _DEF["tk"], 128)
    return pl.pallas_call(
        functools.partial(_dense_ln_kernel, eps=eps),
        out_shape=jax.ShapeDtypeStruct((M, N), jnp.float32),
        grid=(M // tm, K // tk),
        in_specs=[pl.BlockSpec((tm, tk), lambda i, k: (i, k)),
                  pl.BlockSpec((tk, N), lambda i, k: (k, 0)),
                  pl.BlockSpec((1, N), lambda i, k: (0, 0)),
                  pl.BlockSpec((tm, N), lambda i, k: (i, 0)),
                  pl.BlockSpec((1, N), lambda i, k: (0, 0)),
                  pl.BlockSpec((1, N), lambda i, k: (0, 0))],
        out_specs=pl.BlockSpec((tm, N), lambda i, k: (i, 0)),
        scratch_shapes=[pltpu.VMEM((tm, N), jnp.float32)],
        compiler_params=pltpu.CompilerParams(
            dimension_semantics=("parallel", "arbitrary"),
            vmem_limit_bytes=_DEF["vmem_limit"]),
    )(x, w, b.reshape(1, N), residual, gamma.reshape(1, N), beta.reshape(1, N))


# --------------------------------------------------------------------------
# Plain row-tiled LayerNorm (embedding LN), one-pass statistics
# --------------------------------------------------------------------------
def _ln_kernel(x_ref, g_ref, b_ref, o_ref, *, eps):
    x = x_ref[...]
    ex = jnp.mean(x, axis=-1, keepdims=True)
    ex2 = jnp.mean(x * x, axis=-1, keepdims=True)
    var = jnp.maximum(ex2 - ex * ex, 0.0)
    o_ref[...] = ((x - ex) * jax.lax.rsqrt(var + eps) * g_ref[...] + b_ref[...]
                  ).astype(o_ref.dtype)


def layer_norm(x, gamma, beta, *, eps=LN_EPS, tm=None):
    M, H = x.shape
    tm = _pick_tile(M, tm or _DEF["tm"], 8)
    return pl.pallas_call(
        functools.partial(_ln_kernel, eps=eps),
        out_shape=jax.ShapeDtypeStruct((M, H), x.dtype),
        grid=(M // tm,),
        in_specs=[pl.BlockSpec((tm, H), lambda i: (i, 0)),
                  pl.BlockSpec((1, H), lambda i: (0, 0)),
                  pl.BlockSpec((1, H), lambda i: (0, 0))],
        out_specs=pl.BlockSpec((tm, H), lambda i: (i, 0)),
        compiler_params=pltpu.CompilerParams(dimension_semantics=("parallel",)),
    )(x, gamma.reshape(1, H), beta.reshape(1, H))


# --------------------------------------------------------------------------
# Multi-head attention: grid (B,), heads sliced with static offsets straight
# out of the fused projection slabs (no XLA head transposes / column slices).
# Context written directly into the merged lane-dense (B*T, H) layout.
# Causal + key-pad masks are generated in-kernel (key-pad from a (B,1,T) bias);
# softmax scale is folded into the Q projection weights.
# --------------------------------------------------------------------------
def _attn_kernel(*refs, nh, d, k_off, v_off, causal, has_key_bias, separate_kv):
    idx = 0
    q_ref = refs[idx]; idx += 1
    if separate_kv:
        kv_ref = refs[idx]; idx += 1
    else:
        kv_ref = q_ref
    kb_ref = None
    if has_key_bias:
        kb_ref = refs[idx]; idx += 1
    o_ref, p_ref = refs[idx], refs[idx + 1]

    T = q_ref.shape[0]
    S = kv_ref.shape[0]

    bias = None
    if causal:
        rows = jax.lax.broadcasted_iota(jnp.int32, (T, S), 0)
        cols = jax.lax.broadcasted_iota(jnp.int32, (T, S), 1)
        bias = jnp.where(cols > rows, jnp.float32(NEG_INF), jnp.float32(0.0))
    if has_key_bias:
        kb = kb_ref[0]                                    # (1, S) additive f32
        bias = kb if bias is None else bias + kb

    # static per-head loop: only one head's (T, S) scores live at a time
    for h in range(nh):
        q = q_ref[:, h * d:(h + 1) * d]                    # (T, d) bf16
        k = kv_ref[:, k_off + h * d:k_off + (h + 1) * d]   # (S, d) bf16
        v = kv_ref[:, v_off + h * d:v_off + (h + 1) * d]   # (S, d) bf16
        s = jax.lax.dot_general(q, k, (((1,), (1,)), ((), ())),
                                preferred_element_type=jnp.float32)   # (T, S)
        if bias is not None:
            s = s + bias
        s = s - jnp.max(s, axis=-1, keepdims=True)
        e = jnp.exp(s)
        p = e * pl.reciprocal(jnp.sum(e, axis=-1, keepdims=True), approx=True)
        p_ref[0, h] = p.astype(p_ref.dtype)                # bf16 probs store
        ctx = jnp.dot(p.astype(jnp.bfloat16), v, preferred_element_type=jnp.float32)
        o_ref[:, h * d:(h + 1) * d] = ctx.astype(o_ref.dtype)


def attention(q_slab, kv_slab, key_bias, *, B, T, S, nh, d, H, k_off, v_off, causal):
    """q_slab: (B*T, >=H) bf16 (head h's queries at cols [h*d, (h+1)*d)),
    kv_slab: (B*S, 2H) bf16 or None (self-attn: K/V live in q_slab at k_off/v_off),
    key_bias: (B, 1, S) additive f32 or None.
    Returns (context (B*T, H) bf16, probs (B, nh, T, S) bf16)."""
    separate_kv = kv_slab is not None
    has_kb = key_bias is not None
    in_specs = [pl.BlockSpec((T, q_slab.shape[1]), lambda b: (b, 0))]
    args = [q_slab]
    if separate_kv:
        in_specs.append(pl.BlockSpec((S, kv_slab.shape[1]), lambda b: (b, 0)))
        args.append(kv_slab)
    if has_kb:
        in_specs.append(pl.BlockSpec((1, 1, S), lambda b: (b, 0, 0)))
        args.append(key_bias)
    kernel = functools.partial(
        _attn_kernel, nh=nh, d=d, k_off=k_off, v_off=v_off, causal=causal,
        has_key_bias=has_kb, separate_kv=separate_kv)
    # TODO(synk): for very long S a KV-tiled online-softmax (flash) variant would bound
    # the per-step VMEM further; the (B,nh,T,S) probs output (required by the module's
    # return signature) is the dominant cost either way.
    return pl.pallas_call(
        kernel,
        out_shape=(jax.ShapeDtypeStruct((B * T, H), jnp.bfloat16),
                   jax.ShapeDtypeStruct((B, nh, T, S), jnp.bfloat16)),
        grid=(B,),
        in_specs=in_specs,
        out_specs=(pl.BlockSpec((T, H), lambda b: (b, 0)),
                   pl.BlockSpec((1, nh, T, S), lambda b: (b, 0, 0, 0))),
        compiler_params=pltpu.CompilerParams(dimension_semantics=("parallel",)),
    )(*args)


# --------------------------------------------------------------------------
# Parameters
# --------------------------------------------------------------------------
def _dense_init(key, fan_in, fan_out):
    w = 0.02 * jax.random.normal(key, (fan_in, fan_out), jnp.float32)
    b = jnp.zeros((fan_out,), jnp.float32)
    return w, b


def init_params(key, vocab, max_pos, H, inter, num_layers, num_heads):
    head_dim = H // num_heads
    scale = 1.0 / math.sqrt(head_dim)
    keys = jax.random.split(key, 2 + num_layers)
    params = {
        "word_emb": 0.02 * jax.random.normal(keys[0], (vocab, H), jnp.float32),
        "pos_emb": 0.02 * jax.random.normal(keys[1], (max_pos, H), jnp.float32),
        "emb_ln_g": jnp.ones((H,), jnp.float32),
        "emb_ln_b": jnp.zeros((H,), jnp.float32),
        "layers": [],
    }
    for l in range(num_layers):
        lk = jax.random.split(keys[2 + l], 10)
        q_w, q_b = _dense_init(lk[0], H, H)
        k_w, k_b = _dense_init(lk[1], H, H)
        v_w, v_b = _dense_init(lk[2], H, H)
        ao_w, ao_b = _dense_init(lk[3], H, H)
        q2_w, q2_b = _dense_init(lk[4], H, H)
        k2_w, k2_b = _dense_init(lk[5], H, H)
        v2_w, v2_b = _dense_init(lk[6], H, H)
        co_w, co_b = _dense_init(lk[7], H, H)
        fi_w, fi_b = _dense_init(lk[8], H, inter)
        fo_w, fo_b = _dense_init(lk[9], inter, H)
        lp = {
            # fused QKV; 1/sqrt(head_dim) folded into the Q slice; bf16 MXU weights
            "qkv_w": jnp.concatenate([q_w * scale, k_w, v_w], axis=1).astype(jnp.bfloat16),
            "qkv_b": jnp.concatenate([q_b * scale, k_b, v_b], axis=0),
            "ao_w": ao_w.astype(jnp.bfloat16), "ao_b": ao_b,
            "ln1_g": jnp.ones((H,), jnp.float32), "ln1_b": jnp.zeros((H,), jnp.float32),
            "q2_w": (q2_w * scale).astype(jnp.bfloat16), "q2_b": q2_b * scale,
            "kv2_w": jnp.concatenate([k2_w, v2_w], axis=1).astype(jnp.bfloat16),
            "kv2_b": jnp.concatenate([k2_b, v2_b], axis=0),
            "co_w": co_w.astype(jnp.bfloat16), "co_b": co_b,
            "ln2_g": jnp.ones((H,), jnp.float32), "ln2_b": jnp.zeros((H,), jnp.float32),
            "fi_w": fi_w.astype(jnp.bfloat16), "fi_b": fi_b,
            "fo_w": fo_w.astype(jnp.bfloat16), "fo_b": fo_b,
            "ln3_g": jnp.ones((H,), jnp.float32), "ln3_b": jnp.zeros((H,), jnp.float32),
        }
        params["layers"].append(lp)
    return params


# --------------------------------------------------------------------------
# Decoder layer / full forward
# --------------------------------------------------------------------------
def decoder_layer(lp, hidden, enc_flat, key_bias, num_heads, head_dim):
    B, T, H = hidden.shape
    S = enc_flat.shape[0] // B
    x = hidden.reshape(B * T, H)                                     # f32 residual stream

    # ---- masked self-attention: one fused QKV matmul, heads sliced in-kernel ----
    qkv = dense(x, lp["qkv_w"], lp["qkv_b"])                         # (B*T, 3H) bf16
    ctx, intra_p = attention(qkv, None, key_bias, B=B, T=T, S=T,
                             nh=num_heads, d=head_dim, H=H,
                             k_off=H, v_off=2 * H, causal=True)
    h1 = dense_ln_residual(ctx, lp["ao_w"], lp["ao_b"], x, lp["ln1_g"], lp["ln1_b"])

    # ---- cross-attention (src has no padding -> no mask at all) ----
    q2 = dense(h1, lp["q2_w"], lp["q2_b"])                           # (B*T, H) bf16
    kv2 = dense(enc_flat, lp["kv2_w"], lp["kv2_b"])                  # (B*S, 2H) bf16
    ctx2, inter_p = attention(q2, kv2, None, B=B, T=T, S=S,
                              nh=num_heads, d=head_dim, H=H,
                              k_off=0, v_off=H, causal=False)
    h2 = dense_ln_residual(ctx2, lp["co_w"], lp["co_b"], h1, lp["ln2_g"], lp["ln2_b"])

    # ---- feed-forward (GELU fused into first matmul, residual+LN into second) ----
    inter = dense(h2, lp["fi_w"], lp["fi_b"], activation="gelu")     # (B*T, inter) bf16
    h3 = dense_ln_residual(inter, lp["fo_w"], lp["fo_b"], h2, lp["ln3_g"], lp["ln3_b"])

    return h3.reshape(B, T, H), intra_p, inter_p


def transformer_decoder_forward(params, input_ids, encoder_hidden_states, num_heads):
    B, T = input_ids.shape
    H = params["word_emb"].shape[1]
    S = encoder_hidden_states.shape[1]
    head_dim = H // num_heads

    # O(B*T) additive key-pad bias; the causal mask is generated inside the attention
    # kernel from iota compares (matches get_attn_key_pad_mask + get_subsequent_mask).
    key_bias = jnp.where(input_ids == PAD, NEG_INF, 0.0).astype(jnp.float32).reshape(B, 1, T)
    # src_seq = ones -> encoder key-pad mask is all-False -> cross-attn mask omitted.

    # embedding gather is glue; LayerNorm runs in a Pallas kernel
    emb = params["word_emb"][input_ids] + params["pos_emb"][:T][None, :, :]
    hidden = layer_norm(emb.reshape(B * T, H),
                        params["emb_ln_g"], params["emb_ln_b"]).reshape(B, T, H)
    # dropout is identity in eval mode

    enc_flat = encoder_hidden_states.reshape(B * S, H)

    all_hidden_states = [hidden]
    all_intra, all_inter = (), ()
    for lp in params["layers"]:
        h, intra_p, inter_p = decoder_layer(lp, all_hidden_states[-1], enc_flat,
                                            key_bias, num_heads, head_dim)
        all_hidden_states.append(h)
        all_intra = all_intra + (intra_p,)
        all_inter = all_inter + (inter_p,)

    # TODO(synk): NARFormer path (enhance_input resampling / mean-repeat) not exercised;
    # this implements the autoregressive decoding_type branch with eval-mode dropout.
    return {"hidden_states": all_hidden_states[-1],
            "all_hidden_states": all_hidden_states,
            "all_intra_attentions": all_intra,
            "all_inter_attentions": all_inter}


# --------------------------------------------------------------------------
if __name__ == "__main__":
    B, T, S = 2, 8, 16
    H, NUM_HEADS, INTER, NUM_LAYERS = 32, 4, 64, 2
    VOCAB, MAX_POS = 50, 32

    key = jax.random.PRNGKey(0)
    k_ids, k_enc, k_params = jax.random.split(key, 3)

    input_ids = jax.random.randint(k_ids, (B, T), 1, VOCAB, dtype=jnp.int32)
    input_ids = input_ids.at[1, -2:].set(PAD)                # some padding in batch 1
    encoder_hidden_states = jax.random.normal(k_enc, (B, S, H), jnp.float32)

    params = init_params(k_params, VOCAB, MAX_POS, H, INTER, NUM_LAYERS, NUM_HEADS)

    out = transformer_decoder_forward(params, input_ids, encoder_hidden_states,
                                      num_heads=NUM_HEADS)
    jax.block_until_ready(out["hidden_states"])
    assert out["hidden_states"].shape == (B, T, H)
    assert len(out["all_hidden_states"]) == NUM_LAYERS + 1
    assert out["all_intra_attentions"][0].shape == (B, NUM_HEADS, T, T)
    assert out["all_inter_attentions"][0].shape == (B, NUM_HEADS, T, S)
    print("KERNEL_OK")
</pallas_src>

<mosaic_0001>
module attributes {stable_mosaic.version = 11 : i64} {
  func.func @_ln_kernel(%arg0: i32, %arg1: memref<16x32xf32, #tpu.memory_space<vmem>>, %arg2: memref<1x32xf32, #tpu.memory_space<vmem>>, %arg3: memref<1x32xf32, #tpu.memory_space<vmem>>, %arg4: memref<16x32xf32, #tpu.memory_space<vmem>>) attributes {dimension_semantics = [#tpu.dimension_semantics<parallel>], iteration_bounds = array<i64: 1>, scalar_prefetch = 0 : i64, scratch_operands = 0 : i64, tpu.core_type = #tpu.core_type<tc>, window_params = [{transform_indices = @transform_0, window_bounds = array<i64: 16, 32>}, {pipeline_mode = #tpu.pipeline_mode<synchronous>, transform_indices = @transform_1, window_bounds = array<i64: 1, 32>}, {pipeline_mode = #tpu.pipeline_mode<synchronous>, transform_indices = @transform_2, window_bounds = array<i64: 1, 32>}, {transform_indices = @transform_3, window_bounds = array<i64: 16, 32>}]} {
    %c0 = arith.constant 0 : index
    %c0_0 = arith.constant 0 : index
    %0 = vector.load %arg1[%c0, %c0_0] : memref<16x32xf32, #tpu.memory_space<vmem>>, vector<16x32xf32>
    %cst = arith.constant dense<0.000000e+00> : vector<16xf32>
    %1 = vector.multi_reduction <add>, %0, %cst [1] : vector<16x32xf32> to vector<16xf32>
    %2 = vector.shape_cast %1 : vector<16xf32> to vector<16x1xf32>
    %cst_1 = arith.constant 3.200000e+01 : f32
    %3 = vector.broadcast %cst_1 : f32 to vector<16x1xf32>
    %4 = arith.divf %2, %3 : vector<16x1xf32>
    %5 = arith.mulf %0, %0 : vector<16x32xf32>
    %cst_2 = arith.constant dense<0.000000e+00> : vector<16xf32>
    %6 = vector.multi_reduction <add>, %5, %cst_2 [1] : vector<16x32xf32> to vector<16xf32>
    %7 = vector.shape_cast %6 : vector<16xf32> to vector<16x1xf32>
    %cst_3 = arith.constant 3.200000e+01 : f32
    %8 = vector.broadcast %cst_3 : f32 to vector<16x1xf32>
    %9 = arith.divf %7, %8 : vector<16x1xf32>
    %10 = arith.mulf %4, %4 : vector<16x1xf32>
    %11 = arith.subf %9, %10 : vector<16x1xf32>
    %cst_4 = arith.constant 0.000000e+00 : f32
    %12 = vector.broadcast %cst_4 : f32 to vector<16x1xf32>
    %13 = arith.maximumf %11, %12 : vector<16x1xf32>
    %14 = vector.broadcast %4 : vector<16x1xf32> to vector<16x32xf32>
    %15 = arith.subf %0, %14 : vector<16x32xf32>
    %cst_5 = arith.constant 9.99999996E-13 : f32
    %16 = vector.broadcast %cst_5 : f32 to vector<16x1xf32>
    %17 = arith.addf %13, %16 : vector<16x1xf32>
    %18 = math.rsqrt %17 : vector<16x1xf32>
    %19 = vector.broadcast %18 : vector<16x1xf32> to vector<16x32xf32>
    %20 = arith.mulf %15, %19 : vector<16x32xf32>
    %c0_6 = arith.constant 0 : index
    %c0_7 = arith.constant 0 : index
    %21 = vector.load %arg2[%c0_6, %c0_7] : memref<1x32xf32, #tpu.memory_space<vmem>>, vector<1x32xf32>
    %22 = vector.broadcast %21 : vector<1x32xf32> to vector<16x32xf32>
    %23 = arith.mulf %20, %22 : vector<16x32xf32>
    %c0_8 = arith.constant 0 : index
    %c0_9 = arith.constant 0 : index
    %24 = vector.load %arg3[%c0_8, %c0_9] : memref<1x32xf32, #tpu.memory_space<vmem>>, vector<1x32xf32>
    %25 = vector.broadcast %24 : vector<1x32xf32> to vector<16x32xf32>
    %26 = arith.addf %23, %25 : vector<16x32xf32>
    %c0_10 = arith.constant 0 : index
    %c0_11 = arith.constant 0 : index
    %27 = vector.load %arg4[%c0_10, %c0_11] : memref<16x32xf32, #tpu.memory_space<vmem>>, vector<16x32xf32>
    tpu.vector_store %arg4[%c0_10, %c0_11], %26 {strides = array<i32>} : memref<16x32xf32, #tpu.memory_space<vmem>>, vector<16x32xf32>,
    return
  }
  func.func @transform_0(%arg0: i32) -> (i32, i32) {
    %c0_i32 = arith.constant 0 : i32
    %c0_i32_0 = arith.constant 0 : i32
    return %arg0, %c0_i32 : i32, i32
  }
  func.func @transform_1(%arg0: i32) -> (i32, i32) {
    %c0_i32 = arith.constant 0 : i32
    %c0_i32_0 = arith.constant 0 : i32
    %c0_i32_1 = arith.constant 0 : i32
    return %c0_i32, %c0_i32_0 : i32, i32
  }
  func.func @transform_2(%arg0: i32) -> (i32, i32) {
    %c0_i32 = arith.constant 0 : i32
    %c0_i32_0 = arith.constant 0 : i32
    %c0_i32_1 = arith.constant 0 : i32
    return %c0_i32, %c0_i32_0 : i32, i32
  }
  func.func @transform_3(%arg0: i32) -> (i32, i32) {
    %c0_i32 = arith.constant 0 : i32
    %c0_i32_0 = arith.constant 0 : i32
    return %arg0, %c0_i32 : i32, i32
  }
}

</mosaic_0001>

<llo_original>
// kernel: tpu_custom_call.1
$region0: #{tpu_custom_call.1}
  #allocation0 [shape = 'u32[]', space=smem, size = 0x4, offset = 0x4, fixed_abs, tag = 'smem constant byte address 0x4 - core index']
  #allocation1 [shape = 'u32[144,128]{1,0:T(1,128)}', space=vmem, size = 0x12000, scoped, tag = 'internal scratch']
  %s0 = inlined_call_operand.hbm [shape: f32[16,32], index: 0, kind: input, shape index: {}]
  %s1 = inlined_call_operand.vmem [shape: f32[1,32], index: 1, kind: input, shape index: {}]
  %s2 = inlined_call_operand.vmem [shape: f32[1,32], index: 2, kind: input, shape index: {}]
  %s3 = inlined_call_operand.hbm [shape: f32[16,32], index: 3, kind: output, shape index: {}]
  %s4 = sld [smem:[#allocation0]]
  $region26: #{tpu_custom_call.1} parent=0
    _
  %s6 = ssub.s32 1, %s4
  %s7 = scalar_select 0, %s6, %s4
  $region1: #{tpu_custom_call.1} parent=0
    #allocation2 [shape = 'u8[8192]{0}', space=vmem, size = 0x2000, scoped, tag = 'input window, operand 0, single buffered']
    #allocation3 [shape = 's32[1]{0}', space=sflag, size = 0x4, scoped, tag = 'scoped memory for tpu_custom_call.1']
    #allocation4 [shape = 's32[1]{0}', space=sflag, size = 0x4, scoped, tag = 'scoped memory for tpu_custom_call.1']
    #allocation5 [shape = 'u8[8192]{0}', space=vmem, size = 0x2000, scoped, tag = 'output window, operand 0, single buffered']
    %8 = vsyncpa [#allocation3], 0
    %9 = vsyncpa [#allocation4], 0
    // Predicated region
    $region2: #{tpu_custom_call.1} parent=1 // pred_check
      _
    $region3: #{tpu_custom_call.1} parent=1 // pred_check_branch
      %11 = sbr.rel (0) target = $region5
    $region4: #{tpu_custom_call.1} parent=1 // pred_region
      %s13 = ssub.s32 256, 256
      %14 = vsyncadd [#allocation3], %s13
      %s15 = sshll.u32 [#allocation2], 4
      %s16 = int_to_ptr.vmem [resolvable:$true] %s15
      %21 = dma.hbm_to_vmem [thread:$0]  %s0, 256, %s16, [#allocation3], 128, 128, 8
    $region5: #{tpu_custom_call.1} parent=1 // pred_fallthru
      _
    // Predicated region
    $region6: #{tpu_custom_call.1} parent=1 // pred_check
      _
    $region7: #{tpu_custom_call.1} parent=1 // pred_check_branch
      %23 = sbr.rel (0) target = $region9
    $region8: #{tpu_custom_call.1} parent=1 // pred_region
      _
    $region9: #{tpu_custom_call.1} parent=1 // pred_fallthru
      _
    // Predicated region
    $region10: #{tpu_custom_call.1} parent=1 // pred_check
      _
    $region11: #{tpu_custom_call.1} parent=1 // pred_check_branch
      %25 = sbr.rel (0) target = $region13
    $region12: #{tpu_custom_call.1} parent=1 // pred_region
      _
    $region13: #{tpu_custom_call.1} parent=1 // pred_fallthru
      _
    // Predicated region
    $region14: #{tpu_custom_call.1} parent=1 // pred_check
      _
    $region15: #{tpu_custom_call.1} parent=1 // pred_check_branch
      %27 = sbr.rel (0) target = $region17
    $region16: #{tpu_custom_call.1} parent=1 // pred_region
      %28 = dma.done [#allocation3], 256
    $region17: #{tpu_custom_call.1} parent=1 // pred_fallthru
      _
    %v29 = vld [vmem:[#allocation2] sm:$0xff]
    %v30 = vld [vmem:[#allocation2 + $0x8] sm:$0xff]
    %vm31 = vcmask 261120
    %v32 = vsel %vm31, %v29, 0.0
    %33 = vadd.xlane.f32.xlu0 %v32
    %v34 = vpop.xlane.xlu0 %33
    %v35 = vsel %vm31, %v30, 0.0
    %36 = vadd.xlane.f32.xlu0 %v35
    %v37 = vpop.xlane.xlu0 %36
    %v38 = vrcp.pop 32.0
    %v39 = vmul.f32 %v34, %v38
    %v40 = vmul.f32 %v37, %v38
    %v41 = vmul.f32 %v29, %v29
    %v42 = vmul.f32 %v30, %v30
    %v43 = vsel %vm31, %v41, 0.0
    %44 = vadd.xlane.f32.xlu0 %v43
    %v45 = vpop.xlane.xlu0 %44
    %v46 = vsel %vm31, %v42, 0.0
    %47 = vadd.xlane.f32.xlu0 %v46
    %v48 = vpop.xlane.xlu0 %47
    %v49 = vmul.f32 %v45, %v38
    %v50 = vmul.f32 %v48, %v38
    %v51 = vmul.f32 %v39, %v39
    %v52 = vmul.f32 %v40, %v40
    %v53 = vsub.f32 %v49, %v51
    %v54 = vsub.f32 %v50, %v52
    %v55 = vmax.f32 %v53, 0.0
    %v56 = vmax.f32 %v54, 0.0
    %v57 = vsub.f32 %v29, %v39
    %v58 = vsub.f32 %v30, %v40
    %v59 = vadd.f32 %v55, 1e-12
    %v60 = vadd.f32 %v56, 1e-12
    %v61 = vrsqrt.pop %v59
    %v62 = vrsqrt.pop %v60
    %v63 = vmul.f32 %v57, %v61
    %v64 = vmul.f32 %v58, %v62
    %v65 = vld [vmem:[%s1] sm:$0x1]
    %v67 = vlaneseq
    %v68 = vshrl.u32 %v67, 7
    %v69 = vsub.s32 0, %v68
    %v70 = vrot.slane %v65, %v69
    %v72 = vmul.f32 %v63, %v70
    %v73 = vmul.f32 %v64, %v70
    %v74 = vld [vmem:[%s2] sm:$0x1]
    %v76 = vlaneseq
    %v77 = vshrl.u32 %v76, 7
    %v78 = vsub.s32 0, %v77
    %v79 = vrot.slane %v74, %v78
    %v81 = vadd.f32 %v72, %v79
    %v82 = vadd.f32 %v73, %v79
    %83 = vst.msk [vmem:[#allocation5] sm:$0xff] %vm31, %v81
    %84 = vst.msk [vmem:[#allocation5 + $0x8] sm:$0xff] %vm31, %v82
    // Predicated region
    $region18: #{tpu_custom_call.1} parent=1 // pred_check
      _
    $region19: #{tpu_custom_call.1} parent=1 // pred_check_branch
      %86 = sbr.rel (0) target = $region21
    $region20: #{tpu_custom_call.1} parent=1 // pred_region
      %s88 = ssub.s32 256, 256
      %89 = vsyncadd [#allocation4], %s88
      %s90 = sshll.u32 [#allocation5], 4
      %s91 = int_to_ptr.vmem [resolvable:$true] %s90
      %96 = dma.vmem_to_hbm [thread:$0]  %s91, 256, %s3, [#allocation4], 128, 128, 8
    $region21: #{tpu_custom_call.1} parent=1 // pred_fallthru
      _
    // Predicated region
    $region22: #{tpu_custom_call.1} parent=1 // pred_check
      _
    $region23: #{tpu_custom_call.1} parent=1 // pred_check_branch
      %98 = sbr.rel (0) target = $region25
    $region24: #{tpu_custom_call.1} parent=1 // pred_region
      %99 = dma.done [#allocation4], 256
    $region25: #{tpu_custom_call.1} parent=1 // pred_fallthru
      _
    %100 = vsyncpa [#allocation3], 1
    %101 = vsyncpa [#allocation4], 1

</llo_original>
